<compile_context>
chip_gen: v6e
topology: v6e:2x2x1
jax: 0.10.0
libtpu: 0.0.40
codegen_flags: <defaults>
</compile_context>

<pallas_src>
import jax
import jax.numpy as jnp
from jax import lax
from jax.experimental import pallas as pl
from jax.experimental.pallas import tpu as pltpu


def _round_up(x, m):
    return ((x + m - 1) // m) * m


def _choose_tile_b(B, tile_b_max):
    """Batch tile: multiple of 8, large (overhead amortization), >=2 grid
    steps when possible (v7x megacore), divisor of round_up(B,8) if that does
    not shrink the tile by more than 2x (avoids the jnp.pad input copy)."""
    Bp8 = _round_up(max(B, 1), 8)
    cap = min(_round_up(tile_b_max, 8), Bp8)
    if Bp8 >= 16:
        cap = min(cap, _round_up((Bp8 + 1) // 2, 8))
    cap = max(cap, 8)
    d = cap
    while d >= max(8, cap // 2):
        if Bp8 % d == 0:
            return d
        d -= 8
    return cap


def _vmem_limit_bytes(tb, E, H1, H2, H3, in_bytes, w_bytes):
    """Rough scoped-VMEM budget for one tile (documents the budget and lets
    large tiles through v5e's 16 MiB default)."""
    io = 2 * 2 * tb * E * in_bytes + 2 * tb * 4             # double-buffered q/r + out row
    weights = 2 * (E * E * 4                                 # weights get 2 buffers each
                   + (2 * E * H1 + H1 * H2 + H2 * H3) * w_bytes
                   + (3 * H1 + H2 + 2 * H3 + 1) * 4)
    acts = tb * (4 * E * 4 + 2 * E * w_bytes                 # f32 copies + casts
                 + H1 * (8 + w_bytes) + H2 * (8 + w_bytes) + H3 * 8 + 16)
    est = io + weights + acts
    # Generous headroom; keep under ~48 MiB so it also fits v7x (64 MiB VMEM).
    return int(min(max(2 * est + (8 << 20), 32 << 20), 48 << 20))


# ---------------------------------------------------------------------------
# Kernel: one batch tile (tb rows) of the full forward pass.
# ---------------------------------------------------------------------------
def bert_ruber_unrefer_kernel(q_ref, r_ref, m_ref,
                              wq_ref, ws_ref, wr_ref, b1_ref,
                              w2_ref, b2_ref,
                              w3_ref, b3_ref,
                              w4_ref, b4_ref,
                              out_ref):
    w_dtype = wq_ref.dtype               # matmul operand dtype (bf16 default / f32)

    q32 = q_ref[...].astype(jnp.float32)  # (tb, E)
    r32 = r_ref[...].astype(jnp.float32)  # (tb, E)

    # Bilinear score kept fully in f32 (tiny FLOPs; avoids bf16 error
    # amplification over the E-term sum): score[b] = (q[b] @ M) . r[b]
    qm = jnp.dot(q32, m_ref[...], preferred_element_type=jnp.float32)   # (tb, E)
    score = jnp.sum(qm * r32, axis=-1, keepdims=True)                   # (tb, 1)

    # layer1 on cat([q, score, r]) with W1 pre-split into [Wq ; Ws ; Wr]:
    #   tanh(q @ Wq + score * Ws + r @ Wr + b1) == tanh(cat(...) @ W1 + b1)
    pre1 = (jnp.dot(q32.astype(w_dtype), wq_ref[...],
                    preferred_element_type=jnp.float32)
            + jnp.dot(r32.astype(w_dtype), wr_ref[...],
                      preferred_element_type=jnp.float32)
            + score * ws_ref[...]
            + b1_ref[...])                                              # (tb, H1) f32

    # tanh in the matmul dtype: bf16 EUP path on v6e/v7x (and no separate
    # down-cast before the next matmul); exact f32 when w_dtype is f32.
    h1 = jnp.tanh(pre1.astype(w_dtype))                                 # (tb, H1)
    h2 = jnp.tanh((jnp.dot(h1, w2_ref[...],
                           preferred_element_type=jnp.float32)
                   + b2_ref[...]).astype(w_dtype))                      # (tb, H2)
    h3 = jnp.tanh(jnp.dot(h2, w3_ref[...],
                          preferred_element_type=jnp.float32)
                  + b3_ref[...])                                        # (tb, H3) f32

    # Final 128 -> 1 layer as w4_row @ h3^T: result is already a lane-dense
    # (1, tb) row, so the output store is full-width instead of tb/8 masked
    # 1-lane stores. (M=1 matmul is tiny; the MXU has slack here.)
    logit = lax.dot_general(w4_ref[...], h3, (((1,), (1,)), ((), ())),
                            preferred_element_type=jnp.float32)         # (1, tb)
    out_ref[...] = jax.nn.sigmoid(logit + b4_ref[...])                  # (1, tb)


# ---------------------------------------------------------------------------
# Wrapper: batch-tiled pallas_call with a lane-dense (num_tiles, tb) output.
# ---------------------------------------------------------------------------
def bert_ruber_unrefer(query, reply, kparams, *, tile_b=2048):
    """query, reply: (B, E) float32.  kparams from prepare_kernel_params().
    Returns (B,) float32."""
    B, E = query.shape
    H1 = kparams["b1"].shape[-1]
    H2 = kparams["b2"].shape[-1]
    H3 = kparams["b3"].shape[-1]

    tb = _choose_tile_b(B, tile_b)
    Bp = _round_up(B, tb)
    if Bp != B:
        pad = ((0, Bp - B), (0, 0))
        query = jnp.pad(query, pad)
        reply = jnp.pad(reply, pad)
    num_tiles = Bp // tb
    grid = (num_tiles,)

    in_bytes = jnp.dtype(query.dtype).itemsize
    w_bytes = jnp.dtype(kparams["Wq"].dtype).itemsize
    vmem_limit = _vmem_limit_bytes(tb, E, H1, H2, H3, in_bytes, w_bytes)

    flops = 2 * Bp * (E * E + E + 2 * E * H1 + H1 * H2 + H2 * H3 + H3)
    transcendentals = Bp * (H1 + H2 + H3 + 1)
    bytes_accessed = (2 * Bp * E * in_bytes + Bp * 4
                      + E * E * 4
                      + (2 * E * H1 + H1 * H2 + H2 * H3) * w_bytes
                      + (3 * H1 + H2 + 2 * H3 + 2) * 4)

    def row_spec(shape):
        return pl.BlockSpec(shape, lambda i: (i, 0))

    def const_spec(shape):
        # Constant block index: weight stays resident in VMEM across the grid.
        return pl.BlockSpec(shape, lambda i: (0, 0))

    in_specs = [
        row_spec((tb, E)),        # query tile
        row_spec((tb, E)),        # reply tile
        const_spec((E, E)),       # M (f32)
        const_spec((E, H1)),      # Wq
        const_spec((1, H1)),      # Ws  (score row of W1, f32)
        const_spec((E, H1)),      # Wr
        const_spec((1, H1)),      # b1
        const_spec((H1, H2)),     # W2
        const_spec((1, H2)),      # b2
        const_spec((H2, H3)),     # W3
        const_spec((1, H3)),      # b3
        const_spec((1, H3)),      # w4 as a (1, 128) row (f32)
        const_spec((1, 1)),       # b4
    ]

    out = pl.pallas_call(
        bert_ruber_unrefer_kernel,
        out_shape=jax.ShapeDtypeStruct((num_tiles, tb), jnp.float32),
        grid=grid,
        in_specs=in_specs,
        out_specs=pl.BlockSpec((1, tb), lambda i: (i, 0)),   # lane-dense row per tile
        compiler_params=pltpu.CompilerParams(
            dimension_semantics=("parallel",),               # megacore on v7x
            vmem_limit_bytes=vmem_limit),
        cost_estimate=pl.CostEstimate(flops=flops,
                                      transcendentals=transcendentals,
                                      bytes_accessed=bytes_accessed),
    )(query, reply,
      kparams["M"], kparams["Wq"], kparams["Ws"], kparams["Wr"], kparams["b1"],
      kparams["W2"], kparams["b2"], kparams["W3"], kparams["b3"],
      kparams["w4_row"], kparams["b4"])
    return out.reshape(-1)[:B]


# ---------------------------------------------------------------------------
# Parameter handling.
# ---------------------------------------------------------------------------
def init_params(key, embedding_size):
    """Deterministic synthetic init matching the module's parameter shapes.
    Linear weights are stored transposed to (in, out) for direct x @ W use."""
    E = embedding_size
    ks = jax.random.split(key, 9)
    u = lambda k, shape, s=0.1: jax.random.uniform(k, shape, jnp.float32, -s, s)
    return {
        "M": jax.random.uniform(ks[0], (E, E), jnp.float32),   # torch.rand-like
        "W1": u(ks[1], (2 * E + 1, 256)),
        "b1": u(ks[2], (1, 256)),
        "W2": u(ks[3], (256, 512)),
        "b2": u(ks[4], (1, 512)),
        "W3": u(ks[5], (512, 128)),
        "b3": u(ks[6], (1, 128)),
        "W4": u(ks[7], (128, 1)),
        "b4": u(ks[8], (1, 1)),
    }


def prepare_kernel_params(params, matmul_dtype=jnp.bfloat16):
    """One-time reshaping of torch-style params into kernel layout:
    split W1 into [Wq; Ws; Wr], transpose W4 to a row, cast the big matmul
    weights to bf16 by default (M / biases / score row / w4 stay f32)."""
    E = params["M"].shape[0]
    W1 = params["W1"]
    return {
        "M":      jnp.asarray(params["M"], jnp.float32),        # score path stays f32
        "Wq":     jnp.asarray(W1[:E, :], matmul_dtype),
        "Ws":     jnp.asarray(W1[E:E + 1, :], jnp.float32),
        "Wr":     jnp.asarray(W1[E + 1:, :], matmul_dtype),
        "b1":     jnp.asarray(params["b1"], jnp.float32),
        "W2":     jnp.asarray(params["W2"], matmul_dtype),
        "b2":     jnp.asarray(params["b2"], jnp.float32),
        "W3":     jnp.asarray(params["W3"], matmul_dtype),
        "b3":     jnp.asarray(params["b3"], jnp.float32),
        "w4_row": jnp.asarray(params["W4"].T, jnp.float32),      # (1, 128)
        "b4":     jnp.asarray(params["b4"], jnp.float32),
    }


def reference_forward(query, reply, params):
    """Pure-JAX reference mirroring the PyTorch forward exactly (f32)."""
    qh = query[:, None, :]
    rh = reply[:, :, None]
    score = jnp.matmul(jnp.matmul(qh, params["M"]), rh)[:, :, 0]    # (B, 1)
    lin = jnp.concatenate([query, score, reply], axis=1)            # (B, 2E+1)
    lin = jnp.tanh(lin @ params["W1"] + params["b1"])
    lin = jnp.tanh(lin @ params["W2"] + params["b2"])
    lin = jnp.tanh(lin @ params["W3"] + params["b3"])
    return jax.nn.sigmoid(lin @ params["W4"] + params["b4"])[:, 0]


if __name__ == "__main__":
    EMB = 32
    key = jax.random.PRNGKey(0)
    k_params, k_q, k_r = jax.random.split(key, 3)
    params = init_params(k_params, EMB)

    # --- f32 exact path, single tile ----------------------------------------
    kp_f32 = prepare_kernel_params(params, jnp.float32)
    B1 = 8
    q1 = jax.random.normal(k_q, (B1, EMB), jnp.float32)
    r1 = jax.random.normal(k_r, (B1, EMB), jnp.float32)
    out1 = jax.block_until_ready(bert_ruber_unrefer(q1, r1, kp_f32))
    ref1 = reference_forward(q1, r1, params)
    assert out1.shape == (B1,)
    assert jnp.allclose(out1, ref1, atol=1e-5, rtol=1e-5), (out1, ref1)

    # --- f32, multi-tile grid (divisor-snapped tile, no input padding) -------
    B2 = 40
    k_q2, k_r2 = jax.random.split(jax.random.PRNGKey(1), 2)
    q2 = jax.random.normal(k_q2, (B2, EMB), jnp.float32)
    r2 = jax.random.normal(k_r2, (B2, EMB), jnp.float32)
    out2 = jax.block_until_ready(bert_ruber_unrefer(q2, r2, kp_f32, tile_b=16))
    ref2 = reference_forward(q2, r2, params)
    assert out2.shape == (B2,)
    assert jnp.allclose(out2, ref2, atol=1e-5, rtol=1e-5), (out2, ref2)

    # --- default bf16 matmul path (+ batch-padding path, 2-step grid) --------
    kp_bf16 = prepare_kernel_params(params)   # bf16 weights by default now
    B3 = 100
    k_q3, k_r3 = jax.random.split(jax.random.PRNGKey(2), 2)
    q3 = jax.random.normal(k_q3, (B3, EMB), jnp.float32)
    r3 = jax.random.normal(k_r3, (B3, EMB), jnp.float32)
    out3 = jax.block_until_ready(bert_ruber_unrefer(q3, r3, kp_bf16))
    ref3 = reference_forward(q3, r3, params)
    assert out3.shape == (B3,)
    assert jnp.allclose(out3, ref3, atol=5e-2, rtol=0.0), (out3, ref3)

    print("KERNEL_OK")
</pallas_src>

<mosaic_0001>
module attributes {stable_mosaic.version = 11 : i64} {
  func.func @bert_ruber_unrefer_kernel(%arg0: i32, %arg1: memref<8x32xf32, #tpu.memory_space<vmem>>, %arg2: memref<8x32xf32, #tpu.memory_space<vmem>>, %arg3: memref<32x32xf32, #tpu.memory_space<vmem>>, %arg4: memref<32x256xf32, #tpu.memory_space<vmem>>, %arg5: memref<1x256xf32, #tpu.memory_space<vmem>>, %arg6: memref<32x256xf32, #tpu.memory_space<vmem>>, %arg7: memref<1x256xf32, #tpu.memory_space<vmem>>, %arg8: memref<256x512xf32, #tpu.memory_space<vmem>>, %arg9: memref<1x512xf32, #tpu.memory_space<vmem>>, %arg10: memref<512x128xf32, #tpu.memory_space<vmem>>, %arg11: memref<1x128xf32, #tpu.memory_space<vmem>>, %arg12: memref<1x128xf32, #tpu.memory_space<vmem>>, %arg13: memref<1x1xf32, #tpu.memory_space<vmem>>, %arg14: memref<1x8xf32, #tpu.memory_space<vmem>>) attributes {dimension_semantics = [#tpu.dimension_semantics<parallel>], iteration_bounds = array<i64: 1>, scalar_prefetch = 0 : i64, scratch_operands = 0 : i64, tpu.core_type = #tpu.core_type<tc>, window_params = [{transform_indices = @transform_0, window_bounds = array<i64: 8, 32>}, {transform_indices = @transform_1, window_bounds = array<i64: 8, 32>}, {pipeline_mode = #tpu.pipeline_mode<synchronous>, transform_indices = @transform_2, window_bounds = array<i64: 32, 32>}, {pipeline_mode = #tpu.pipeline_mode<synchronous>, transform_indices = @transform_3, window_bounds = array<i64: 32, 256>}, {pipeline_mode = #tpu.pipeline_mode<synchronous>, transform_indices = @transform_4, window_bounds = array<i64: 1, 256>}, {pipeline_mode = #tpu.pipeline_mode<synchronous>, transform_indices = @transform_5, window_bounds = array<i64: 32, 256>}, {pipeline_mode = #tpu.pipeline_mode<synchronous>, transform_indices = @transform_6, window_bounds = array<i64: 1, 256>}, {pipeline_mode = #tpu.pipeline_mode<synchronous>, transform_indices = @transform_7, window_bounds = array<i64: 256, 512>}, {pipeline_mode = #tpu.pipeline_mode<synchronous>, transform_indices = @transform_8, window_bounds = array<i64: 1, 512>}, {pipeline_mode = #tpu.pipeline_mode<synchronous>, transform_indices = @transform_9, window_bounds = array<i64: 512, 128>}, {pipeline_mode = #tpu.pipeline_mode<synchronous>, transform_indices = @transform_10, window_bounds = array<i64: 1, 128>}, {pipeline_mode = #tpu.pipeline_mode<synchronous>, transform_indices = @transform_11, window_bounds = array<i64: 1, 128>}, {pipeline_mode = #tpu.pipeline_mode<synchronous>, transform_indices = @transform_12, window_bounds = array<i64: 1, 1>}, {transform_indices = @transform_13, window_bounds = array<i64: 1, 8>}]} {
    %c0 = arith.constant 0 : index
    %c0_0 = arith.constant 0 : index
    %0 = vector.load %arg1[%c0, %c0_0] : memref<8x32xf32, #tpu.memory_space<vmem>>, vector<8x32xf32>
    %c0_1 = arith.constant 0 : index
    %c0_2 = arith.constant 0 : index
    %1 = vector.load %arg2[%c0_1, %c0_2] : memref<8x32xf32, #tpu.memory_space<vmem>>, vector<8x32xf32>
    %c0_3 = arith.constant 0 : index
    %c0_4 = arith.constant 0 : index
    %2 = vector.load %arg3[%c0_3, %c0_4] : memref<32x32xf32, #tpu.memory_space<vmem>>, vector<32x32xf32>
    %cst = arith.constant dense<0.000000e+00> : vector<8x32xf32>
    %3 = tpu.matmul %0, %2, %cst {dimension_numbers = #tpu.dot_dimension_numbers<[1], [0], [0], [1], [0, 0, 1, 1], [], []>} : vector<8x32xf32>, vector<32x32xf32>, vector<8x32xf32> -> vector<8x32xf32>
    %4 = arith.mulf %3, %1 : vector<8x32xf32>
    %cst_5 = arith.constant dense<0.000000e+00> : vector<8xf32>
    %5 = vector.multi_reduction <add>, %4, %cst_5 [1] : vector<8x32xf32> to vector<8xf32>
    %6 = vector.shape_cast %5 : vector<8xf32> to vector<8x1xf32>
    %c0_6 = arith.constant 0 : index
    %c0_7 = arith.constant 0 : index
    %7 = vector.load %arg4[%c0_6, %c0_7] : memref<32x256xf32, #tpu.memory_space<vmem>>, vector<32x256xf32>
    %cst_8 = arith.constant dense<0.000000e+00> : vector<8x256xf32>
    %8 = tpu.matmul %0, %7, %cst_8 {dimension_numbers = #tpu.dot_dimension_numbers<[1], [0], [0], [1], [0, 0, 1, 1], [], []>} : vector<8x32xf32>, vector<32x256xf32>, vector<8x256xf32> -> vector<8x256xf32>
    %c0_9 = arith.constant 0 : index
    %c0_10 = arith.constant 0 : index
    %9 = vector.load %arg6[%c0_9, %c0_10] : memref<32x256xf32, #tpu.memory_space<vmem>>, vector<32x256xf32>
    %cst_11 = arith.constant dense<0.000000e+00> : vector<8x256xf32>
    %10 = tpu.matmul %1, %9, %cst_11 {dimension_numbers = #tpu.dot_dimension_numbers<[1], [0], [0], [1], [0, 0, 1, 1], [], []>} : vector<8x32xf32>, vector<32x256xf32>, vector<8x256xf32> -> vector<8x256xf32>
    %11 = arith.addf %8, %10 : vector<8x256xf32>
    %c0_12 = arith.constant 0 : index
    %c0_13 = arith.constant 0 : index
    %12 = vector.load %arg5[%c0_12, %c0_13] : memref<1x256xf32, #tpu.memory_space<vmem>>, vector<1x256xf32>
    %13 = vector.broadcast %6 : vector<8x1xf32> to vector<8x256xf32>
    %14 = vector.broadcast %12 : vector<1x256xf32> to vector<8x256xf32>
    %15 = arith.mulf %13, %14 : vector<8x256xf32>
    %16 = arith.addf %11, %15 : vector<8x256xf32>
    %c0_14 = arith.constant 0 : index
    %c0_15 = arith.constant 0 : index
    %17 = vector.load %arg7[%c0_14, %c0_15] : memref<1x256xf32, #tpu.memory_space<vmem>>, vector<1x256xf32>
    %18 = vector.broadcast %17 : vector<1x256xf32> to vector<8x256xf32>
    %19 = arith.addf %16, %18 : vector<8x256xf32>
    %20 = math.tanh %19 : vector<8x256xf32>
    %c0_16 = arith.constant 0 : index
    %c0_17 = arith.constant 0 : index
    %21 = vector.load %arg8[%c0_16, %c0_17] : memref<256x512xf32, #tpu.memory_space<vmem>>, vector<256x512xf32>
    %cst_18 = arith.constant dense<0.000000e+00> : vector<8x512xf32>
    %22 = tpu.matmul %20, %21, %cst_18 {dimension_numbers = #tpu.dot_dimension_numbers<[1], [0], [0], [1], [0, 0, 1, 1], [], []>} : vector<8x256xf32>, vector<256x512xf32>, vector<8x512xf32> -> vector<8x512xf32>
    %c0_19 = arith.constant 0 : index
    %c0_20 = arith.constant 0 : index
    %23 = vector.load %arg9[%c0_19, %c0_20] : memref<1x512xf32, #tpu.memory_space<vmem>>, vector<1x512xf32>
    %24 = vector.broadcast %23 : vector<1x512xf32> to vector<8x512xf32>
    %25 = arith.addf %22, %24 : vector<8x512xf32>
    %26 = math.tanh %25 : vector<8x512xf32>
    %c0_21 = arith.constant 0 : index
    %c0_22 = arith.constant 0 : index
    %27 = vector.load %arg10[%c0_21, %c0_22] : memref<512x128xf32, #tpu.memory_space<vmem>>, vector<512x128xf32>
    %cst_23 = arith.constant dense<0.000000e+00> : vector<8x128xf32>
    %28 = tpu.matmul %26, %27, %cst_23 {dimension_numbers = #tpu.dot_dimension_numbers<[1], [0], [0], [1], [0, 0, 1, 1], [], []>} : vector<8x512xf32>, vector<512x128xf32>, vector<8x128xf32> -> vector<8x128xf32>
    %c0_24 = arith.constant 0 : index
    %c0_25 = arith.constant 0 : index
    %29 = vector.load %arg11[%c0_24, %c0_25] : memref<1x128xf32, #tpu.memory_space<vmem>>, vector<1x128xf32>
    %30 = vector.broadcast %29 : vector<1x128xf32> to vector<8x128xf32>
    %31 = arith.addf %28, %30 : vector<8x128xf32>
    %32 = math.tanh %31 : vector<8x128xf32>
    %c0_26 = arith.constant 0 : index
    %c0_27 = arith.constant 0 : index
    %33 = vector.load %arg12[%c0_26, %c0_27] : memref<1x128xf32, #tpu.memory_space<vmem>>, vector<1x128xf32>
    %cst_28 = arith.constant dense<0.000000e+00> : vector<1x8xf32>
    %34 = tpu.matmul %33, %32, %cst_28 {dimension_numbers = #tpu.dot_dimension_numbers<[1], [1], [0], [0], [0, 0, 1, 0], [], []>} : vector<1x128xf32>, vector<8x128xf32>, vector<1x8xf32> -> vector<1x8xf32>
    %c0_29 = arith.constant 0 : index
    %c0_30 = arith.constant 0 : index
    %35 = vector.load %arg13[%c0_29, %c0_30] : memref<1x1xf32, #tpu.memory_space<vmem>>, vector<1x1xf32>
    %36 = vector.broadcast %35 : vector<1x1xf32> to vector<1x8xf32>
    %37 = arith.addf %34, %36 : vector<1x8xf32>
    %38 = arith.negf %37 : vector<1x8xf32>
    %39 = math.exp %38 : vector<1x8xf32>
    %cst_31 = arith.constant 1.000000e+00 : f32
    %40 = vector.broadcast %cst_31 : f32 to vector<1x8xf32>
    %41 = arith.addf %40, %39 : vector<1x8xf32>
    %42 = arith.divf %40, %41 : vector<1x8xf32>
    %c0_32 = arith.constant 0 : index
    %c0_33 = arith.constant 0 : index
    %43 = vector.load %arg14[%c0_32, %c0_33] : memref<1x8xf32, #tpu.memory_space<vmem>>, vector<1x8xf32>
    tpu.vector_store %arg14[%c0_32, %c0_33], %42 {strides = array<i32>} : memref<1x8xf32, #tpu.memory_space<vmem>>, vector<1x8xf32>,
    return
  }
  func.func @transform_0(%arg0: i32) -> (i32, i32) {
    %c0_i32 = arith.constant 0 : i32
    %c0_i32_0 = arith.constant 0 : i32
    return %arg0, %c0_i32 : i32, i32
  }
  func.func @transform_1(%arg0: i32) -> (i32, i32) {
    %c0_i32 = arith.constant 0 : i32
    %c0_i32_0 = arith.constant 0 : i32
    return %arg0, %c0_i32 : i32, i32
  }
  func.func @transform_2(%arg0: i32) -> (i32, i32) {
    %c0_i32 = arith.constant 0 : i32
    %c0_i32_0 = arith.constant 0 : i32
    %c0_i32_1 = arith.constant 0 : i32
    return %c0_i32, %c0_i32_0 : i32, i32
  }
  func.func @transform_3(%arg0: i32) -> (i32, i32) {
    %c0_i32 = arith.constant 0 : i32
    %c0_i32_0 = arith.constant 0 : i32
    %c0_i32_1 = arith.constant 0 : i32
    return %c0_i32, %c0_i32_0 : i32, i32
  }
  func.func @transform_4(%arg0: i32) -> (i32, i32) {
    %c0_i32 = arith.constant 0 : i32
    %c0_i32_0 = arith.constant 0 : i32
    %c0_i32_1 = arith.constant 0 : i32
    return %c0_i32, %c0_i32_0 : i32, i32
  }
  func.func @transform_5(%arg0: i32) -> (i32, i32) {
    %c0_i32 = arith.constant 0 : i32
    %c0_i32_0 = arith.constant 0 : i32
    %c0_i32_1 = arith.constant 0 : i32
    return %c0_i32, %c0_i32_0 : i32, i32
  }
  func.func @transform_6(%arg0: i32) -> (i32, i32) {
    %c0_i32 = arith.constant 0 : i32
    %c0_i32_0 = arith.constant 0 : i32
    %c0_i32_1 = arith.constant 0 : i32
    return %c0_i32, %c0_i32_0 : i32, i32
  }
  func.func @transform_7(%arg0: i32) -> (i32, i32) {
    %c0_i32 = arith.constant 0 : i32
    %c0_i32_0 = arith.constant 0 : i32
    %c0_i32_1 = arith.constant 0 : i32
    return %c0_i32, %c0_i32_0 : i32, i32
  }
  func.func @transform_8(%arg0: i32) -> (i32, i32) {
    %c0_i32 = arith.constant 0 : i32
    %c0_i32_0 = arith.constant 0 : i32
    %c0_i32_1 = arith.constant 0 : i32
    return %c0_i32, %c0_i32_0 : i32, i32
  }
  func.func @transform_9(%arg0: i32) -> (i32, i32) {
    %c0_i32 = arith.constant 0 : i32
    %c0_i32_0 = arith.constant 0 : i32
    %c0_i32_1 = arith.constant 0 : i32
    return %c0_i32, %c0_i32_0 : i32, i32
  }
  func.func @transform_10(%arg0: i32) -> (i32, i32) {
    %c0_i32 = arith.constant 0 : i32
    %c0_i32_0 = arith.constant 0 : i32
    %c0_i32_1 = arith.constant 0 : i32
    return %c0_i32, %c0_i32_0 : i32, i32
  }
  func.func @transform_11(%arg0: i32) -> (i32, i32) {
    %c0_i32 = arith.constant 0 : i32
    %c0_i32_0 = arith.constant 0 : i32
    %c0_i32_1 = arith.constant 0 : i32
    return %c0_i32, %c0_i32_0 : i32, i32
  }
  func.func @transform_12(%arg0: i32) -> (i32, i32) {
    %c0_i32 = arith.constant 0 : i32
    %c0_i32_0 = arith.constant 0 : i32
    %c0_i32_1 = arith.constant 0 : i32
    return %c0_i32, %c0_i32_0 : i32, i32
  }
  func.func @transform_13(%arg0: i32) -> (i32, i32) {
    %c0_i32 = arith.constant 0 : i32
    %c0_i32_0 = arith.constant 0 : i32
    return %arg0, %c0_i32 : i32, i32
  }
}

</mosaic_0001>

<llo_original>
// kernel: tpu_custom_call.1
$region0: #{tpu_custom_call.1}
  #allocation0 [shape = 'u32[]', space=smem, size = 0x4, offset = 0x4, fixed_abs, tag = 'smem constant byte address 0x4 - core index']
  #allocation1 [shape = 'u32[144,128]{1,0:T(1,128)}', space=vmem, size = 0x12000, scoped, tag = 'internal scratch']
  #allocation2 [shape = 'f32[1,1]{1,0:T(1,128)S(1)}', space=vmem, size = 0x200, scoped, tag = 'scoped memory for tpu_custom_call.1']
  %s0 = inlined_call_operand.hbm [shape: f32[8,32], index: 0, kind: input, shape index: {}]
  %s1 = inlined_call_operand.hbm [shape: f32[8,32], index: 1, kind: input, shape index: {}]
  %s2 = inlined_call_operand.hbm [shape: f32[32,32], index: 2, kind: input, shape index: {}]
  %s3 = inlined_call_operand.hbm [shape: f32[32,256], index: 3, kind: input, shape index: {}]
  %s4 = inlined_call_operand.vmem [shape: f32[1,256], index: 4, kind: input, shape index: {}]
  %s5 = inlined_call_operand.hbm [shape: f32[32,256], index: 5, kind: input, shape index: {}]
  %s6 = inlined_call_operand.vmem [shape: f32[1,256], index: 6, kind: input, shape index: {}]
  %s7 = inlined_call_operand.hbm [shape: f32[256,512], index: 7, kind: input, shape index: {}]
  %s8 = inlined_call_operand.vmem [shape: f32[1,512], index: 8, kind: input, shape index: {}]
  %s9 = inlined_call_operand.hbm [shape: f32[512,128], index: 9, kind: input, shape index: {}]
  %s10 = inlined_call_operand.vmem [shape: f32[1,128], index: 10, kind: input, shape index: {}]
  %s11 = inlined_call_operand.vmem [shape: f32[1,128], index: 11, kind: input, shape index: {}]
  %s12 = inlined_call_operand.<no memory space> [shape: f32[1,1], index: 12, kind: input, shape index: {}]
  %s13 = inlined_call_operand.hbm [shape: f32[1,8], index: 13, kind: output, shape index: {}]
  %s14 = sld [smem:[#allocation0]]
  $region90: #{tpu_custom_call.1} parent=0
    _
  %s16 = ssub.s32 1, %s14
  %s17 = scalar_select 0, %s16, %s14
  %v18 = vstv %s12
  %19 = vst [vmem:[#allocation2] sm:$0x1] %v18
  $region1: #{tpu_custom_call.1} parent=0
    #allocation3 [shape = 'u8[4096]{0}', space=vmem, size = 0x1000, scoped, tag = 'input window, operand 0, single buffered']
    #allocation4 [shape = 's32[1]{0}', space=sflag, size = 0x4, scoped, tag = 'scoped memory for tpu_custom_call.1']
    #allocation5 [shape = 's32[1]{0}', space=sflag, size = 0x4, scoped, tag = 'scoped memory for tpu_custom_call.1']
    #allocation6 [shape = 'u8[4096]{0}', space=vmem, size = 0x1000, scoped, tag = 'input window, operand 1, single buffered']
    #allocation7 [shape = 's32[1]{0}', space=sflag, size = 0x4, scoped, tag = 'scoped memory for tpu_custom_call.1']
    #allocation8 [shape = 'u8[16384]{0}', space=vmem, size = 0x4000, scoped, tag = 'input window, operand 2, single buffered']
    #allocation9 [shape = 'u8[32768]{0}', space=vmem, size = 0x8000, scoped, tag = 'input window, operand 3, single buffered']
    #allocation10 [shape = 's32[1]{0}', space=sflag, size = 0x4, scoped, tag = 'scoped memory for tpu_custom_call.1']
    #allocation11 [shape = 'u8[32768]{0}', space=vmem, size = 0x8000, scoped, tag = 'input window, operand 5, single buffered']
    #allocation12 [shape = 'u8[524288]{0}', space=vmem, size = 0x80000, scoped, tag = 'input window, operand 7, single buffered']
    #allocation13 [shape = 's32[1]{0}', space=sflag, size = 0x4, scoped, tag = 'scoped memory for tpu_custom_call.1']
    #allocation14 [shape = 'u8[262144]{0}', space=vmem, size = 0x40000, scoped, tag = 'input window, operand 9, single buffered']
    #allocation15 [shape = 'u8[512]{0}', space=vmem, size = 0x400, scoped, tag = 'output window, operand 0, single buffered']
    %20 = vsyncpa [#allocation4], 0
    %21 = vsyncpa [#allocation7], 0
    %22 = vsyncpa [#allocation10], 0
    %23 = vsyncpa [#allocation13], 0
    %24 = vsyncpa [#allocation5], 0
    // Predicated region
    $region2: #{tpu_custom_call.1} parent=1 // pred_check
      _
    $region3: #{tpu_custom_call.1} parent=1 // pred_check_branch
      %26 = sbr.rel (0) target = $region5
    $region4: #{tpu_custom_call.1} parent=1 // pred_region
      %s28 = ssub.s32 128, 128
      %29 = vsyncadd [#allocation4], %s28
      %s31 = sshll.u32 [#allocation3], 4
      %s32 = int_to_ptr.vmem [resolvable:$true] %s31
      %34 = dma.hbm_to_vmem [thread:$0]  %s0, 128, %s32, [#allocation4]
    $region5: #{tpu_custom_call.1} parent=1 // pred_fallthru
      _
    // Predicated region
    $region6: #{tpu_custom_call.1} parent=1 // pred_check
      _
    $region7: #{tpu_custom_call.1} parent=1 // pred_check_branch
      %36 = sbr.rel (0) target = $region9
    $region8: #{tpu_custom_call.1} parent=1 // pred_region
      %s38 = ssub.s32 128, 128
      %39 = vsyncadd [#allocation7], %s38
      %s41 = sshll.u32 [#allocation6], 4
      %s42 = int_to_ptr.vmem [resolvable:$true] %s41
      %44 = dma.hbm_to_vmem [thread:$0]  %s1, 128, %s42, [#allocation7]
    $region9: #{tpu_custom_call.1} parent=1 // pred_fallthru
      _
    // Predicated region
    $region10: #{tpu_custom_call.1} parent=1 // pred_check
      _
    $region11: #{tpu_custom_call.1} parent=1 // pred_check_branch
      %46 = sbr.rel (0) target = $region13
    $region12: #{tpu_custom_call.1} parent=1 // pred_region
      %s48 = ssub.s32 512, 512
      %49 = vsyncadd [#allocation7], %s48
      %s50 = sshll.u32 [#allocation8], 4
      %s51 = int_to_ptr.vmem [resolvable:$true] %s50
      %56 = dma.hbm_to_vmem [thread:$0]  %s2, 512, %s51, [#allocation7], 128, 128, 8
    $region13: #{tpu_custom_call.1} parent=1 // pred_fallthru
      _
    // Predicated region
    $region14: #{tpu_custom_call.1} parent=1 // pred_check
      _
    $region15: #{tpu_custom_call.1} parent=1 // pred_check_branch
      %58 = sbr.rel (0) target = $region17
    $region16: #{tpu_custom_call.1} parent=1 // pred_region
      %s60 = ssub.s32 1024, 1024
      %61 = vsyncadd [#allocation10], %s60
      %s62 = sshll.u32 [#allocation9], 4
      %s63 = int_to_ptr.vmem [resolvable:$true] %s62
      %68 = dma.hbm_to_vmem [thread:$0]  %s3, 1024, %s63, [#allocation10], 256, 256, 16
    $region17: #{tpu_custom_call.1} parent=1 // pred_fallthru
      _
    // Predicated region
    $region18: #{tpu_custom_call.1} parent=1 // pred_check
      _
    $region19: #{tpu_custom_call.1} parent=1 // pred_check_branch
      %70 = sbr.rel (0) target = $region21
    $region20: #{tpu_custom_call.1} parent=1 // pred_region
      _
    $region21: #{tpu_custom_call.1} parent=1 // pred_fallthru
      _
    // Predicated region
    $region22: #{tpu_custom_call.1} parent=1 // pred_check
      _
    $region23: #{tpu_custom_call.1} parent=1 // pred_check_branch
      %72 = sbr.rel (0) target = $region25
    $region24: #{tpu_custom_call.1} parent=1 // pred_region
      %s74 = ssub.s32 1024, 1024
      %75 = vsyncadd [#allocation10], %s74
      %s76 = sshll.u32 [#allocation11], 4
      %s77 = int_to_ptr.vmem [resolvable:$true] %s76
      %82 = dma.hbm_to_vmem [thread:$0]  %s5, 1024, %s77, [#allocation10], 256, 256, 16
    $region25: #{tpu_custom_call.1} parent=1 // pred_fallthru
      _
    // Predicated region
    $region26: #{tpu_custom_call.1} parent=1 // pred_check
      _
    $region27: #{tpu_custom_call.1} parent=1 // pred_check_branch
      %84 = sbr.rel (0) target = $region29
    $region28: #{tpu_custom_call.1} parent=1 // pred_region
      _
    $region29: #{tpu_custom_call.1} parent=1 // pred_fallthru
      _
    // Predicated region
    $region30: #{tpu_custom_call.1} parent=1 // pred_check
      _
    $region31: #{tpu_custom_call.1} parent=1 // pred_check_branch
      %86 = sbr.rel (0) target = $region33
    $region32: #{tpu_custom_call.1} parent=1 // pred_region
      %s88 = ssub.s32 16384, 16384
      %89 = vsyncadd [#allocation13], %s88
      %s90 = sshll.u32 [#allocation12], 4
      %s91 = int_to_ptr.vmem [resolvable:$true] %s90
      %96 = dma.hbm_to_vmem [thread:$0]  %s7, 16384, %s91, [#allocation13], 512, 512, 32
    $region33: #{tpu_custom_call.1} parent=1 // pred_fallthru
      _
    // Predicated region
    $region34: #{tpu_custom_call.1} parent=1 // pred_check
      _
    $region35: #{tpu_custom_call.1} parent=1 // pred_check_branch
      %98 = sbr.rel (0) target = $region37
    $region36: #{tpu_custom_call.1} parent=1 // pred_region
      _
    $region37: #{tpu_custom_call.1} parent=1 // pred_fallthru
      _
    // Predicated region
    $region38: #{tpu_custom_call.1} parent=1 // pred_check
      _
    $region39: #{tpu_custom_call.1} parent=1 // pred_check_branch
      %100 = sbr.rel (0) target = $region41
    $region40: #{tpu_custom_call.1} parent=1 // pred_region
      %s102 = ssub.s32 8192, 8192
      %103 = vsyncadd [#allocation13], %s102
      %s104 = sshll.u32 [#allocation14], 4
      %s105 = int_to_ptr.vmem [resolvable:$true] %s104
      %110 = dma.hbm_to_vmem [thread:$0]  %s9, 8192, %s105, [#allocation13], 128, 128, 8
    $region41: #{tpu_custom_call.1} parent=1 // pred_fallthru
      _
    // Predicated region
    $region42: #{tpu_custom_call.1} parent=1 // pred_check
      _
    $region43: #{tpu_custom_call.1} parent=1 // pred_check_branch
      %112 = sbr.rel (0) target = $region45
    $region44: #{tpu_custom_call.1} parent=1 // pred_region
      _
    $region45: #{tpu_custom_call.1} parent=1 // pred_fallthru
      _
    // Predicated region
    $region46: #{tpu_custom_call.1} parent=1 // pred_check
      _
    $region47: #{tpu_custom_call.1} parent=1 // pred_check_branch
      %114 = sbr.rel (0) target = $region49
    $region48: #{tpu_custom_call.1} parent=1 // pred_region
      _
    $region49: #{tpu_custom_call.1} parent=1 // pred_fallthru
      _
    // Predicated region
    $region50: #{tpu_custom_call.1} parent=1 // pred_check
      _
    $region51: #{tpu_custom_call.1} parent=1 // pred_check_branch
      %116 = sbr.rel (0) target = $region53
    $region52: #{tpu_custom_call.1} parent=1 // pred_region
      _
    $region53: #{tpu_custom_call.1} parent=1 // pred_fallthru
      _
    // Predicated region
    $region54: #{tpu_custom_call.1} parent=1 // pred_check
      _
    $region55: #{tpu_custom_call.1} parent=1 // pred_check_branch
      %118 = sbr.rel (0) target = $region57
    $region56: #{tpu_custom_call.1} parent=1 // pred_region
      %119 = dma.done [#allocation4], 128
    $region57: #{tpu_custom_call.1} parent=1 // pred_fallthru
      _
    // Predicated region
    $region58: #{tpu_custom_call.1} parent=1 // pred_check
      _
    $region59: #{tpu_custom_call.1} parent=1 // pred_check_branch
      %121 = sbr.rel (0) target = $region61
    $region60: #{tpu_custom_call.1} parent=1 // pred_region
      %122 = dma.done [#allocation7], 128
    $region61: #{tpu_custom_call.1} parent=1 // pred_fallthru
      _
    // Predicated region
    $region62: #{tpu_custom_call.1} parent=1 // pred_check
      _
    $region63: #{tpu_custom_call.1} parent=1 // pred_check_branch
      %124 = sbr.rel (0) target = $region65
    $region64: #{tpu_custom_call.1} parent=1 // pred_region
      %125 = dma.done [#allocation7], 512
    $region65: #{tpu_custom_call.1} parent=1 // pred_fallthru
      _
    // Predicated region
    $region66: #{tpu_custom_call.1} parent=1 // pred_check
      _
    $region67: #{tpu_custom_call.1} parent=1 // pred_check_branch
      %127 = sbr.rel (0) target = $region69
    $region68: #{tpu_custom_call.1} parent=1 // pred_region
      %128 = dma.done [#allocation10], 1024
    $region69: #{tpu_custom_call.1} parent=1 // pred_fallthru
      _
    // Predicated region
    $region70: #{tpu_custom_call.1} parent=1 // pred_check
      _
    $region71: #{tpu_custom_call.1} parent=1 // pred_check_branch
      %130 = sbr.rel (0) target = $region73
    $region72: #{tpu_custom_call.1} parent=1 // pred_region
      %131 = dma.done [#allocation10], 1024
    $region73: #{tpu_custom_call.1} parent=1 // pred_fallthru
      _
    // Predicated region
    $region74: #{tpu_custom_call.1} parent=1 // pred_check
      _
    $region75: #{tpu_custom_call.1} parent=1 // pred_check_branch
      %133 = sbr.rel (0) target = $region77
    $region76: #{tpu_custom_call.1} parent=1 // pred_region
      %134 = dma.done [#allocation13], 16384
    $region77: #{tpu_custom_call.1} parent=1 // pred_fallthru
      _
    // Predicated region
    $region78: #{tpu_custom_call.1} parent=1 // pred_check
      _
    $region79: #{tpu_custom_call.1} parent=1 // pred_check_branch
      %136 = sbr.rel (0) target = $region81
    $region80: #{tpu_custom_call.1} parent=1 // pred_region
      %137 = dma.done [#allocation13], 8192
    $region81: #{tpu_custom_call.1} parent=1 // pred_fallthru
      _
    %v138 = vld [vmem:[#allocation3] sm:$0xff]
    %v139 = vld [vmem:[#allocation6] sm:$0xff]
    %v140 = vld [vmem:[#allocation8] sm:$0xff]
    %v141 = vld [vmem:[#allocation8 + $0x8] sm:$0xff]
    %v142 = vld [vmem:[#allocation8 + $0x10] sm:$0xff]
    %v143 = vld [vmem:[#allocation8 + $0x18] sm:$0xff]
    %vm144 = vcmask 261120
    %v146 = vsel %vm144, %v138, 0
    %148 = vmatprep.subr.mxu0 0.0
    %149 = vmatpush1.msra.mxu0 0.0
    %150 = vmatprep.subr.mxu0 0.0
    %151 = vmatpush1.msra.mxu0 0.0
    %152 = vmatprep.subr.mxu0 0.0
    %153 = vmatpush1.msra.mxu0 0.0
    %154 = vmatprep.subr.mxu0 0.0
    %155 = vmatpush1.msra.mxu0 0.0
    %156 = vmatprep.subr.mxu0 0.0
    %157 = vmatpush1.msra.mxu0 0.0
    %158 = vmatprep.subr.mxu0 0.0
    %159 = vmatpush1.msra.mxu0 0.0
    %160 = vmatprep.subr.mxu0 0.0
    %161 = vmatpush1.msra.mxu0 0.0
    %162 = vmatprep.subr.mxu0 0.0
    %163 = vmatpush1.msra.mxu0 0.0
    %164 = vmatprep.subr.mxu0 0.0
    %165 = vmatpush1.msra.mxu0 0.0
    %166 = vmatprep.subr.mxu0 0.0
    %167 = vmatpush1.msra.mxu0 0.0
    %168 = vmatprep.subr.mxu0 0.0
    %169 = vmatpush1.msra.mxu0 0.0
    %170 = vmatprep.subr.mxu0 0.0
    %171 = vmatpush1.msra.mxu0 0.0
    %172 = vmatprep.subr.mxu0 0.0
    %173 = vmatpush1.msra.mxu0 %v143
    %174 = vmatprep.subr.mxu0 0.0
    %175 = vmatpush1.msra.mxu0 %v142
    %176 = vmatprep.subr.mxu0 0.0
    %177 = vmatpush1.msra.mxu0 %v141
    %178 = vmatprep.subr.mxu0 0.0
    %179 = vmatpush1.msra.mxu0 %v140
    %180 = vmatprep.subr.mxu0 0.0
    %181 = vmatpush2.msra.mxu0 0.0
    %182 = vmatprep.subr.mxu0 0.0
    %183 = vmatpush2.msra.mxu0 0.0
    %184 = vmatprep.subr.mxu0 0.0
    %185 = vmatpush2.msra.mxu0 0.0
    %186 = vmatprep.subr.mxu0 0.0
    %187 = vmatpush2.msra.mxu0 0.0
    %188 = vmatprep.subr.mxu0 0.0
    %189 = vmatpush2.msra.mxu0 0.0
    %190 = vmatprep.subr.mxu0 0.0
    %191 = vmatpush2.msra.mxu0 0.0
    %192 = vmatprep.subr.mxu0 0.0
    %193 = vmatpush2.msra.mxu0 0.0
    %194 = vmatprep.subr.mxu0 0.0
    %195 = vmatpush2.msra.mxu0 0.0
    %196 = vmatprep.subr.mxu0 0.0
    %197 = vmatpush2.msra.mxu0 0.0
    %198 = vmatprep.subr.mxu0 0.0
    %199 = vmatpush2.msra.mxu0 0.0
    %200 = vmatprep.subr.mxu0 0.0
    %201 = vmatpush2.msra.mxu0 0.0
    %202 = vmatprep.subr.mxu0 0.0
    %203 = vmatpush2.msra.mxu0 0.0
    %204 = vmatprep.subr.mxu0 0.0
    %205 = vmatpush2.msra.mxu0 0.0
    %206 = vmatprep.subr.mxu0 0.0
    %207 = vmatpush2.msra.mxu0 0.0
    %208 = vmatprep.subr.mxu0 0.0
    %209 = vmatpush2.msra.mxu0 0.0
    %210 = vmatprep.subr.mxu0 0.0
    %211 = vmatpush2.msra.mxu0 0.0
    %212 = vmatprep.mubr.f32.mxu0 0.0
    %213 = vmatmul.mubr.f32.gmra.mxu0 %v146
    %v214 = vpop.f32.mrf.mxu0
    %v215 = vadd.f32 0.0, %v214
    %v216 = vpop.f32.mrf.mxu0
    %217 = vdwg.mxu0
    %v218 = vmul.f32 %v215, %v139
    %v219 = vsel %vm144, %v218, 0.0
    %220 = vadd.xlane.f32.xlu0 %v219
    %v221 = vpop.xlane.xlu0 %220
    %v222 = vld [vmem:[#allocation9] sm:$0xff]
    %v223 = vld [vmem:[#allocation9 + $0x8] sm:$0xff]
    %v224 = vld [vmem:[#allocation9 + $0x10] sm:$0xff]
    %v225 = vld [vmem:[#allocation9 + $0x18] sm:$0xff]
    %v226 = vld [vmem:[#allocation9 + $0x20] sm:$0xff]
    %v227 = vld [vmem:[#allocation9 + $0x28] sm:$0xff]
    %v228 = vld [vmem:[#allocation9 + $0x30] sm:$0xff]
    %v229 = vld [vmem:[#allocation9 + $0x38] sm:$0xff]
    %v230 = vld [vmem:[#allocation11] sm:$0xff]
    %v231 = vld [vmem:[#allocation11 + $0x8] sm:$0xff]
    %v232 = vld [vmem:[#allocation11 + $0x10] sm:$0xff]
    %v233 = vld [vmem:[#allocation11 + $0x18] sm:$0xff]
    %v234 = vld [vmem:[#allocation11 + $0x20] sm:$0xff]
    %v235 = vld [vmem:[#allocation11 + $0x28] sm:$0xff]
    %v236 = vld [vmem:[#allocation11 + $0x30] sm:$0xff]
    %v237 = vld [vmem:[#allocation11 + $0x38] sm:$0xff]
    %v239 = vsel %vm144, %v139, 0
    %241 = vmatprep.subr.mxu0 0.0
    %242 = vmatpush1.msra.mxu0 0.0
    %243 = vmatprep.subr.mxu0 0.0
    %244 = vmatpush1.msra.mxu0 0.0
    %245 = vmatprep.subr.mxu0 0.0
    %246 = vmatpush1.msra.mxu0 0.0
    %247 = vmatprep.subr.mxu0 0.0
    %248 = vmatpush1.msra.mxu0 0.0
    %249 = vmatprep.subr.mxu0 0.0
    %250 = vmatpush1.msra.mxu0 0.0
    %251 = vmatprep.subr.mxu0 0.0
    %252 = vmatpush1.msra.mxu0 0.0
    %253 = vmatprep.subr.mxu0 0.0
    %254 = vmatpush1.msra.mxu0 0.0
    %255 = vmatprep.subr.mxu0 0.0
    %256 = vmatpush1.msra.mxu0 0.0
    %257 = vmatprep.subr.mxu0 0.0
    %258 = vmatpush1.msra.mxu0 0.0
    %259 = vmatprep.subr.mxu0 0.0
    %260 = vmatpush1.msra.mxu0 0.0
    %261 = vmatprep.subr.mxu0 0.0
    %262 = vmatpush1.msra.mxu0 0.0
    %263 = vmatprep.subr.mxu0 0.0
    %264 = vmatpush1.msra.mxu0 0.0
    %265 = vmatprep.subr.mxu0 %v237
    %266 = vmatpush1.msra.mxu0 %v236
    %267 = vmatprep.subr.mxu0 %v235
    %268 = vmatpush1.msra.mxu0 %v234
    %269 = vmatprep.subr.mxu0 %v233
    %270 = vmatpush1.msra.mxu0 %v232
    %271 = vmatprep.subr.mxu0 %v231
    %272 = vmatpush1.msra.mxu0 %v230
    %273 = vmatprep.subr.mxu0 0.0
    %274 = vmatpush2.msra.mxu0 0.0
    %275 = vmatprep.subr.mxu0 0.0
    %276 = vmatpush2.msra.mxu0 0.0
    %277 = vmatprep.subr.mxu0 0.0
    %278 = vmatpush2.msra.mxu0 0.0
    %279 = vmatprep.subr.mxu0 0.0
    %280 = vmatpush2.msra.mxu0 0.0
    %281 = vmatprep.subr.mxu0 0.0
    %282 = vmatpush2.msra.mxu0 0.0
    %283 = vmatprep.subr.mxu0 0.0
    %284 = vmatpush2.msra.mxu0 0.0
    %285 = vmatprep.subr.mxu0 0.0
    %286 = vmatpush2.msra.mxu0 0.0
    %287 = vmatprep.subr.mxu0 0.0
    %288 = vmatpush2.msra.mxu0 0.0
    %289 = vmatprep.subr.mxu0 0.0
    %290 = vmatpush2.msra.mxu0 0.0
    %291 = vmatprep.subr.mxu0 0.0
    %292 = vmatpush2.msra.mxu0 0.0
    %293 = vmatprep.subr.mxu0 0.0
    %294 = vmatpush2.msra.mxu0 0.0
    %295 = vmatprep.subr.mxu0 0.0
    %296 = vmatpush2.msra.mxu0 0.0
    %297 = vmatprep.subr.mxu0 0.0
    %298 = vmatpush2.msra.mxu0 0.0
    %299 = vmatprep.subr.mxu0 0.0
    %300 = vmatpush2.msra.mxu0 0.0
    %301 = vmatprep.subr.mxu0 0.0
    %302 = vmatpush2.msra.mxu0 0.0
    %303 = vmatprep.subr.mxu0 0.0
    %304 = vmatpush2.msra.mxu0 0.0
    %305 = vmatprep.mubr.f32.mxu0 0.0
    %306 = vmatmul.mubr.f32.gmra.mxu0 %v239
    %v307 = vpop.f32.mrf.mxu0
    %v308 = vadd.f32 0.0, %v307
    %v309 = vpop.f32.mrf.mxu0
    %v310 = vadd.f32 0.0, %v309
    %311 = vdwg.mxu0
    %312 = vmatprep.subr.mxu0 0.0
    %313 = vmatpush1.msra.mxu0 0.0
    %314 = vmatprep.subr.mxu0 0.0
    %315 = vmatpush1.msra.mxu0 0.0
    %316 = vmatprep.subr.mxu0 0.0
    %317 = vmatpush1.msra.mxu0 0.0
    %318 = vmatprep.subr.mxu0 0.0
    %319 = vmatpush1.msra.mxu0 0.0
    %320 = vmatprep.subr.mxu0 0.0
    %321 = vmatpush1.msra.mxu0 0.0
    %322 = vmatprep.subr.mxu0 0.0
    %323 = vmatpush1.msra.mxu0 0.0
    %324 = vmatprep.subr.mxu0 0.0
    %325 = vmatpush1.msra.mxu0 0.0
    %326 = vmatprep.subr.mxu0 0.0
    %327 = vmatpush1.msra.mxu0 0.0
    %328 = vmatprep.subr.mxu0 0.0
    %329 = vmatpush1.msra.mxu0 0.0
    %330 = vmatprep.subr.mxu0 0.0
    %331 = vmatpush1.msra.mxu0 0.0
    %332 = vmatprep.subr.mxu0 0.0
    %333 = vmatpush1.msra.mxu0 0.0
    %334 = vmatprep.subr.mxu0 0.0
    %335 = vmatpush1.msra.mxu0 0.0
    %336 = vmatprep.subr.mxu0 %v229
    %337 = vmatpush1.msra.mxu0 %v228
    %338 = vmatprep.subr.mxu0 %v227
    %339 = vmatpush1.msra.mxu0 %v226
    %340 = vmatprep.subr.mxu0 %v225
    %341 = vmatpush1.msra.mxu0 %v224
    %342 = vmatprep.subr.mxu0 %v223
    %343 = vmatpush1.msra.mxu0 %v222
    %344 = vmatprep.subr.mxu0 0.0
    %345 = vmatpush2.msra.mxu0 0.0
    %346 = vmatprep.subr.mxu0 0.0
    %347 = vmatpush2.msra.mxu0 0.0
    %348 = vmatprep.subr.mxu0 0.0
    %349 = vmatpush2.msra.mxu0 0.0
    %350 = vmatprep.subr.mxu0 0.0
    %351 = vmatpush2.msra.mxu0 0.0
    %352 = vmatprep.subr.mxu0 0.0
    %353 = vmatpush2.msra.mxu0 0.0
    %354 = vmatprep.subr.mxu0 0.0
    %355 = vmatpush2.msra.mxu0 0.0
    %356 = vmatprep.subr.mxu0 0.0
    %357 = vmatpush2.msra.mxu0 0.0
    %358 = vmatprep.subr.mxu0 0.0
    %359 = vmatpush2.msra.mxu0 0.0
    %360 = vmatprep.subr.mxu0 0.0
    %361 = vmatpush2.msra.mxu0 0.0
    %362 = vmatprep.subr.mxu0 0.0
    %363 = vmatpush2.msra.mxu0 0.0
    %364 = vmatprep.subr.mxu0 0.0
    %365 = vmatpush2.msra.mxu0 0.0
    %366 = vmatprep.subr.mxu0 0.0
    %367 = vmatpush2.msra.mxu0 0.0
    %368 = vmatprep.subr.mxu0 0.0
    %369 = vmatpush2.msra.mxu0 0.0
    %370 = vmatprep.subr.mxu0 0.0
    %371 = vmatpush2.msra.mxu0 0.0
    %372 = vmatprep.subr.mxu0 0.0
    %373 = vmatpush2.msra.mxu0 0.0
    %374 = vmatprep.subr.mxu0 0.0
    %375 = vmatpush2.msra.mxu0 0.0
    %376 = vmatprep.mubr.f32.mxu0 0.0
    %377 = vmatmul.mubr.f32.gmra.mxu0 %v146
    %v378 = vpop.f32.mrf.mxu0
    %v379 = vadd.f32 %v308, %v378
    %v380 = vpop.f32.mrf.mxu0
    %v381 = vadd.f32 %v310, %v380
    %382 = vdwg.mxu0
    %v383 = vld [vmem:[%s4] sm:$0x3]
    %v385 = vlaneseq
    %v386 = vshrl.u32 %v385, 7
    %v387 = vsub.s32 0, %v386
    %v388 = vrot.slane %v383, %v387
    %v389 = vlaneseq
    %v390 = vshrl.u32 %v389, 7
    %v391 = vsub.s32 1, %v390
    %v392 = vrot.slane %v383, %v391
    %v395 = vmul.f32 %v221, %v388
    %v396 = vmul.f32 %v221, %v392
    %v397 = vadd.f32 %v379, %v395
    %v398 = vadd.f32 %v381, %v396
    %v399 = vld [vmem:[%s6] sm:$0x3]
    %v401 = vlaneseq
    %v402 = vshrl.u32 %v401, 7
    %v403 = vsub.s32 0, %v402
    %v404 = vrot.slane %v399, %v403
    %v405 = vlaneseq
    %v406 = vshrl.u32 %v405, 7
    %v407 = vsub.s32 1, %v406
    %v408 = vrot.slane %v399, %v407
    %v411 = vadd.f32 %v397, %v404
    %v412 = vadd.f32 %v398, %v408
    %v413 = vtanh.pop %v411
    %v414 = vtanh.pop %v412
    %v415 = vld [vmem:[#allocation12] sm:$0xff]
    %v416 = vld [vmem:[#allocation12 + $0x8] sm:$0xff]
    %v417 = vld [vmem:[#allocation12 + $0x10] sm:$0xff]
    %v418 = vld [vmem:[#allocation12 + $0x18] sm:$0xff]
    %v419 = vld [vmem:[#allocation12 + $0x20] sm:$0xff]
    %v420 = vld [vmem:[#allocation12 + $0x28] sm:$0xff]
    %v421 = vld [vmem:[#allocation12 + $0x30] sm:$0xff]
    %v422 = vld [vmem:[#allocation12 + $0x38] sm:$0xff]
    %v423 = vld [vmem:[#allocation12 + $0x40] sm:$0xff]
    %v424 = vld [vmem:[#allocation12 + $0x48] sm:$0xff]
    %v425 = vld [vmem:[#allocation12 + $0x50] sm:$0xff]
    %v426 = vld [vmem:[#allocation12 + $0x58] sm:$0xff]
    %v427 = vld [vmem:[#allocation12 + $0x60] sm:$0xff]
    %v428 = vld [vmem:[#allocation12 + $0x68] sm:$0xff]
    %v429 = vld [vmem:[#allocation12 + $0x70] sm:$0xff]
    %v430 = vld [vmem:[#allocation12 + $0x78] sm:$0xff]
    %v431 = vld [vmem:[#allocation12 + $0x80] sm:$0xff]
    %v432 = vld [vmem:[#allocation12 + $0x88] sm:$0xff]
    %v433 = vld [vmem:[#allocation12 + $0x90] sm:$0xff]
    %v434 = vld [vmem:[#allocation12 + $0x98] sm:$0xff]
    %v435 = vld [vmem:[#allocation12 + $0xa0] sm:$0xff]
    %v436 = vld [vmem:[#allocation12 + $0xa8] sm:$0xff]
    %v437 = vld [vmem:[#allocation12 + $0xb0] sm:$0xff]
    %v438 = vld [vmem:[#allocation12 + $0xb8] sm:$0xff]
    %v439 = vld [vmem:[#allocation12 + $0xc0] sm:$0xff]
    %v440 = vld [vmem:[#allocation12 + $0xc8] sm:$0xff]
    %v441 = vld [vmem:[#allocation12 + $0xd0] sm:$0xff]
    %v442 = vld [vmem:[#allocation12 + $0xd8] sm:$0xff]
    %v443 = vld [vmem:[#allocation12 + $0xe0] sm:$0xff]
    %v444 = vld [vmem:[#allocation12 + $0xe8] sm:$0xff]
    %v445 = vld [vmem:[#allocation12 + $0xf0] sm:$0xff]
    %v446 = vld [vmem:[#allocation12 + $0xf8] sm:$0xff]
    %v447 = vld [vmem:[#allocation12 + $0x100] sm:$0xff]
    %v448 = vld [vmem:[#allocation12 + $0x108] sm:$0xff]
    %v449 = vld [vmem:[#allocation12 + $0x110] sm:$0xff]
    %v450 = vld [vmem:[#allocation12 + $0x118] sm:$0xff]
    %v451 = vld [vmem:[#allocation12 + $0x120] sm:$0xff]
    %v452 = vld [vmem:[#allocation12 + $0x128] sm:$0xff]
    %v453 = vld [vmem:[#allocation12 + $0x130] sm:$0xff]
    %v454 = vld [vmem:[#allocation12 + $0x138] sm:$0xff]
    %v455 = vld [vmem:[#allocation12 + $0x140] sm:$0xff]
    %v456 = vld [vmem:[#allocation12 + $0x148] sm:$0xff]
    %v457 = vld [vmem:[#allocation12 + $0x150] sm:$0xff]
    %v458 = vld [vmem:[#allocation12 + $0x158] sm:$0xff]
    %v459 = vld [vmem:[#allocation12 + $0x160] sm:$0xff]
    %v460 = vld [vmem:[#allocation12 + $0x168] sm:$0xff]
    %v461 = vld [vmem:[#allocation12 + $0x170] sm:$0xff]
    %v462 = vld [vmem:[#allocation12 + $0x178] sm:$0xff]
    %v463 = vld [vmem:[#allocation12 + $0x180] sm:$0xff]
    %v464 = vld [vmem:[#allocation12 + $0x188] sm:$0xff]
    %v465 = vld [vmem:[#allocation12 + $0x190] sm:$0xff]
    %v466 = vld [vmem:[#allocation12 + $0x198] sm:$0xff]
    %v467 = vld [vmem:[#allocation12 + $0x1a0] sm:$0xff]
    %v468 = vld [vmem:[#allocation12 + $0x1a8] sm:$0xff]
    %v469 = vld [vmem:[#allocation12 + $0x1b0] sm:$0xff]
    %v470 = vld [vmem:[#allocation12 + $0x1b8] sm:$0xff]
    %v471 = vld [vmem:[#allocation12 + $0x1c0] sm:$0xff]
    %v472 = vld [vmem:[#allocation12 + $0x1c8] sm:$0xff]
    %v473 = vld [vmem:[#allocation12 + $0x1d0] sm:$0xff]
    %v474 = vld [vmem:[#allocation12 + $0x1d8] sm:$0xff]
    %v475 = vld [vmem:[#allocation12 + $0x1e0] sm:$0xff]
    %v476 = vld [vmem:[#allocation12 + $0x1e8] sm:$0xff]
    %v477 = vld [vmem:[#allocation12 + $0x1f0] sm:$0xff]
    %v478 = vld [vmem:[#allocation12 + $0x1f8] sm:$0xff]
    %v479 = vld [vmem:[#allocation12 + $0x200] sm:$0xff]
    %v480 = vld [vmem:[#allocation12 + $0x208] sm:$0xff]
    %v481 = vld [vmem:[#allocation12 + $0x210] sm:$0xff]
    %v482 = vld [vmem:[#allocation12 + $0x218] sm:$0xff]
    %v483 = vld [vmem:[#allocation12 + $0x220] sm:$0xff]
    %v484 = vld [vmem:[#allocation12 + $0x228] sm:$0xff]
    %v485 = vld [vmem:[#allocation12 + $0x230] sm:$0xff]
    %v486 = vld [vmem:[#allocation12 + $0x238] sm:$0xff]
    %v487 = vld [vmem:[#allocation12 + $0x240] sm:$0xff]
    %v488 = vld [vmem:[#allocation12 + $0x248] sm:$0xff]
    %v489 = vld [vmem:[#allocation12 + $0x250] sm:$0xff]
    %v490 = vld [vmem:[#allocation12 + $0x258] sm:$0xff]
    %v491 = vld [vmem:[#allocation12 + $0x260] sm:$0xff]
    %v492 = vld [vmem:[#allocation12 + $0x268] sm:$0xff]
    %v493 = vld [vmem:[#allocation12 + $0x270] sm:$0xff]
    %v494 = vld [vmem:[#allocation12 + $0x278] sm:$0xff]
    %v495 = vld [vmem:[#allocation12 + $0x280] sm:$0xff]
    %v496 = vld [vmem:[#allocation12 + $0x288] sm:$0xff]
    %v497 = vld [vmem:[#allocation12 + $0x290] sm:$0xff]
    %v498 = vld [vmem:[#allocation12 + $0x298] sm:$0xff]
    %v499 = vld [vmem:[#allocation12 + $0x2a0] sm:$0xff]
    %v500 = vld [vmem:[#allocation12 + $0x2a8] sm:$0xff]
    %v501 = vld [vmem:[#allocation12 + $0x2b0] sm:$0xff]
    %v502 = vld [vmem:[#allocation12 + $0x2b8] sm:$0xff]
    %v503 = vld [vmem:[#allocation12 + $0x2c0] sm:$0xff]
    %v504 = vld [vmem:[#allocation12 + $0x2c8] sm:$0xff]
    %v505 = vld [vmem:[#allocation12 + $0x2d0] sm:$0xff]
    %v506 = vld [vmem:[#allocation12 + $0x2d8] sm:$0xff]
    %v507 = vld [vmem:[#allocation12 + $0x2e0] sm:$0xff]
    %v508 = vld [vmem:[#allocation12 + $0x2e8] sm:$0xff]
    %v509 = vld [vmem:[#allocation12 + $0x2f0] sm:$0xff]
    %v510 = vld [vmem:[#allocation12 + $0x2f8] sm:$0xff]
    %v511 = vld [vmem:[#allocation12 + $0x300] sm:$0xff]
    %v512 = vld [vmem:[#allocation12 + $0x308] sm:$0xff]
    %v513 = vld [vmem:[#allocation12 + $0x310] sm:$0xff]
    %v514 = vld [vmem:[#allocation12 + $0x318] sm:$0xff]
    %v515 = vld [vmem:[#allocation12 + $0x320] sm:$0xff]
    %v516 = vld [vmem:[#allocation12 + $0x328] sm:$0xff]
    %v517 = vld [vmem:[#allocation12 + $0x330] sm:$0xff]
    %v518 = vld [vmem:[#allocation12 + $0x338] sm:$0xff]
    %v519 = vld [vmem:[#allocation12 + $0x340] sm:$0xff]
    %v520 = vld [vmem:[#allocation12 + $0x348] sm:$0xff]
    %v521 = vld [vmem:[#allocation12 + $0x350] sm:$0xff]
    %v522 = vld [vmem:[#allocation12 + $0x358] sm:$0xff]
    %v523 = vld [vmem:[#allocation12 + $0x360] sm:$0xff]
    %v524 = vld [vmem:[#allocation12 + $0x368] sm:$0xff]
    %v525 = vld [vmem:[#allocation12 + $0x370] sm:$0xff]
    %v526 = vld [vmem:[#allocation12 + $0x378] sm:$0xff]
    %v527 = vld [vmem:[#allocation12 + $0x380] sm:$0xff]
    %v528 = vld [vmem:[#allocation12 + $0x388] sm:$0xff]
    %v529 = vld [vmem:[#allocation12 + $0x390] sm:$0xff]
    %v530 = vld [vmem:[#allocation12 + $0x398] sm:$0xff]
    %v531 = vld [vmem:[#allocation12 + $0x3a0] sm:$0xff]
    %v532 = vld [vmem:[#allocation12 + $0x3a8] sm:$0xff]
    %v533 = vld [vmem:[#allocation12 + $0x3b0] sm:$0xff]
    %v534 = vld [vmem:[#allocation12 + $0x3b8] sm:$0xff]
    %v535 = vld [vmem:[#allocation12 + $0x3c0] sm:$0xff]
    %v536 = vld [vmem:[#allocation12 + $0x3c8] sm:$0xff]
    %v537 = vld [vmem:[#allocation12 + $0x3d0] sm:$0xff]
    %v538 = vld [vmem:[#allocation12 + $0x3d8] sm:$0xff]
    %v539 = vld [vmem:[#allocation12 + $0x3e0] sm:$0xff]
    %v540 = vld [vmem:[#allocation12 + $0x3e8] sm:$0xff]
    %v541 = vld [vmem:[#allocation12 + $0x3f0] sm:$0xff]
    %v542 = vld [vmem:[#allocation12 + $0x3f8] sm:$0xff]
    %v543 = vld [vmem:[%s8] sm:$0xf]
    %v545 = vlaneseq
    %v546 = vshrl.u32 %v545, 7
    %v547 = vsub.s32 0, %v546
    %v548 = vrot.slane %v543, %v547
    %v549 = vlaneseq
    %v550 = vshrl.u32 %v549, 7
    %v551 = vsub.s32 1, %v550
    %v552 = vrot.slane %v543, %v551
    %v553 = vlaneseq
    %v554 = vshrl.u32 %v553, 7
    %v555 = vsub.s32 2, %v554
    %v556 = vrot.slane %v543, %v555
    %v557 = vlaneseq
    %v558 = vshrl.u32 %v557, 7
    %v559 = vsub.s32 3, %v558
    %v560 = vrot.slane %v543, %v559
    %565 = vmatprep.subr.mxu0 %v476
    %566 = vmatpush1.msra.mxu0 %v475
    %567 = vmatprep.subr.mxu0 %v472
    %568 = vmatpush1.msra.mxu0 %v471
    %569 = vmatprep.subr.mxu0 %v468
    %570 = vmatpush1.msra.mxu0 %v467
    %571 = vmatprep.subr.mxu0 %v464
    %572 = vmatpush1.msra.mxu0 %v463
    %573 = vmatprep.subr.mxu0 %v460
    %574 = vmatpush1.msra.mxu0 %v459
    %575 = vmatprep.subr.mxu0 %v456
    %576 = vmatpush1.msra.mxu0 %v455
    %577 = vmatprep.subr.mxu0 %v452
    %578 = vmatpush1.msra.mxu0 %v451
    %579 = vmatprep.subr.mxu0 %v448
    %580 = vmatpush1.msra.mxu0 %v447
    %581 = vmatprep.subr.mxu0 %v444
    %582 = vmatpush1.msra.mxu0 %v443
    %583 = vmatprep.subr.mxu0 %v440
    %584 = vmatpush1.msra.mxu0 %v439
    %585 = vmatprep.subr.mxu0 %v436
    %586 = vmatpush1.msra.mxu0 %v435
    %587 = vmatprep.subr.mxu0 %v432
    %588 = vmatpush1.msra.mxu0 %v431
    %589 = vmatprep.subr.mxu0 %v428
    %590 = vmatpush1.msra.mxu0 %v427
    %591 = vmatprep.subr.mxu0 %v424
    %592 = vmatpush1.msra.mxu0 %v423
    %593 = vmatprep.subr.mxu0 %v420
    %594 = vmatpush1.msra.mxu0 %v419
    %595 = vmatprep.subr.mxu0 %v416
    %596 = vmatpush1.msra.mxu0 %v415
    %597 = vmatprep.subr.mxu0 %v540
    %598 = vmatpush2.msra.mxu0 %v539
    %599 = vmatprep.subr.mxu0 %v536
    %600 = vmatpush2.msra.mxu0 %v535
    %601 = vmatprep.subr.mxu0 %v532
    %602 = vmatpush2.msra.mxu0 %v531
    %603 = vmatprep.subr.mxu0 %v528
    %604 = vmatpush2.msra.mxu0 %v527
    %605 = vmatprep.subr.mxu0 %v524
    %606 = vmatpush2.msra.mxu0 %v523
    %607 = vmatprep.subr.mxu0 %v520
    %608 = vmatpush2.msra.mxu0 %v519
    %609 = vmatprep.subr.mxu0 %v516
    %610 = vmatpush2.msra.mxu0 %v515
    %611 = vmatprep.subr.mxu0 %v512
    %612 = vmatpush2.msra.mxu0 %v511
    %613 = vmatprep.subr.mxu0 %v508
    %614 = vmatpush2.msra.mxu0 %v507
    %615 = vmatprep.subr.mxu0 %v504
    %616 = vmatpush2.msra.mxu0 %v503
    %617 = vmatprep.subr.mxu0 %v500
    %618 = vmatpush2.msra.mxu0 %v499
    %619 = vmatprep.subr.mxu0 %v496
    %620 = vmatpush2.msra.mxu0 %v495
    %621 = vmatprep.subr.mxu0 %v492
    %622 = vmatpush2.msra.mxu0 %v491
    %623 = vmatprep.subr.mxu0 %v488
    %624 = vmatpush2.msra.mxu0 %v487
    %625 = vmatprep.subr.mxu0 %v484
    %626 = vmatpush2.msra.mxu0 %v483
    %627 = vmatprep.subr.mxu0 %v480
    %628 = vmatpush2.msra.mxu0 %v479
    %629 = vmatprep.mubr.f32.mxu0 %v414
    %630 = vmatmul.mubr.f32.gmra.mxu0 %v413
    %v631 = vpop.f32.mrf.mxu0
    %v632 = vadd.f32 %v548, %v631
    %v633 = vpop.f32.mrf.mxu0
    %v634 = vadd.f32 %v552, %v633
    %635 = vdwg.mxu0
    %636 = vmatprep.subr.mxu0 %v478
    %637 = vmatpush1.msra.mxu0 %v477
    %638 = vmatprep.subr.mxu0 %v474
    %639 = vmatpush1.msra.mxu0 %v473
    %640 = vmatprep.subr.mxu0 %v470
    %641 = vmatpush1.msra.mxu0 %v469
    %642 = vmatprep.subr.mxu0 %v466
    %643 = vmatpush1.msra.mxu0 %v465
    %644 = vmatprep.subr.mxu0 %v462
    %645 = vmatpush1.msra.mxu0 %v461
    %646 = vmatprep.subr.mxu0 %v458
    %647 = vmatpush1.msra.mxu0 %v457
    %648 = vmatprep.subr.mxu0 %v454
    %649 = vmatpush1.msra.mxu0 %v453
    %650 = vmatprep.subr.mxu0 %v450
    %651 = vmatpush1.msra.mxu0 %v449
    %652 = vmatprep.subr.mxu0 %v446
    %653 = vmatpush1.msra.mxu0 %v445
    %654 = vmatprep.subr.mxu0 %v442
    %655 = vmatpush1.msra.mxu0 %v441
    %656 = vmatprep.subr.mxu0 %v438
    %657 = vmatpush1.msra.mxu0 %v437
    %658 = vmatprep.subr.mxu0 %v434
    %659 = vmatpush1.msra.mxu0 %v433
    %660 = vmatprep.subr.mxu0 %v430
    %661 = vmatpush1.msra.mxu0 %v429
    %662 = vmatprep.subr.mxu0 %v426
    %663 = vmatpush1.msra.mxu0 %v425
    %664 = vmatprep.subr.mxu0 %v422
    %665 = vmatpush1.msra.mxu0 %v421
    %666 = vmatprep.subr.mxu0 %v418
    %667 = vmatpush1.msra.mxu0 %v417
    %668 = vmatprep.subr.mxu0 %v542
    %669 = vmatpush2.msra.mxu0 %v541
    %670 = vmatprep.subr.mxu0 %v538
    %671 = vmatpush2.msra.mxu0 %v537
    %672 = vmatprep.subr.mxu0 %v534
    %673 = vmatpush2.msra.mxu0 %v533
    %674 = vmatprep.subr.mxu0 %v530
    %675 = vmatpush2.msra.mxu0 %v529
    %676 = vmatprep.subr.mxu0 %v526
    %677 = vmatpush2.msra.mxu0 %v525
    %678 = vmatprep.subr.mxu0 %v522
    %679 = vmatpush2.msra.mxu0 %v521
    %680 = vmatprep.subr.mxu0 %v518
    %681 = vmatpush2.msra.mxu0 %v517
    %682 = vmatprep.subr.mxu0 %v514
    %683 = vmatpush2.msra.mxu0 %v513
    %684 = vmatprep.subr.mxu0 %v510
    %685 = vmatpush2.msra.mxu0 %v509
    %686 = vmatprep.subr.mxu0 %v506
    %687 = vmatpush2.msra.mxu0 %v505
    %688 = vmatprep.subr.mxu0 %v502
    %689 = vmatpush2.msra.mxu0 %v501
    %690 = vmatprep.subr.mxu0 %v498
    %691 = vmatpush2.msra.mxu0 %v497
    %692 = vmatprep.subr.mxu0 %v494
    %693 = vmatpush2.msra.mxu0 %v493
    %694 = vmatprep.subr.mxu0 %v490
    %695 = vmatpush2.msra.mxu0 %v489
    %696 = vmatprep.subr.mxu0 %v486
    %697 = vmatpush2.msra.mxu0 %v485
    %698 = vmatprep.subr.mxu0 %v482
    %699 = vmatpush2.msra.mxu0 %v481
    %700 = vmatprep.mubr.f32.mxu0 %v414
    %701 = vmatmul.mubr.f32.gmra.mxu0 %v413
    %v702 = vpop.f32.mrf.mxu0
    %v703 = vadd.f32 %v556, %v702
    %v704 = vpop.f32.mrf.mxu0
    %v705 = vadd.f32 %v560, %v704
    %706 = vdwg.mxu0
    %v707 = vtanh.pop %v632
    %v708 = vtanh.pop %v634
    %v709 = vtanh.pop %v703
    %v710 = vtanh.pop %v705
    %v711 = vld [vmem:[#allocation14] sm:$0xff]
    %v712 = vld [vmem:[#allocation14 + $0x8] sm:$0xff]
    %v713 = vld [vmem:[#allocation14 + $0x10] sm:$0xff]
    %v714 = vld [vmem:[#allocation14 + $0x18] sm:$0xff]
    %v715 = vld [vmem:[#allocation14 + $0x20] sm:$0xff]
    %v716 = vld [vmem:[#allocation14 + $0x28] sm:$0xff]
    %v717 = vld [vmem:[#allocation14 + $0x30] sm:$0xff]
    %v718 = vld [vmem:[#allocation14 + $0x38] sm:$0xff]
    %v719 = vld [vmem:[#allocation14 + $0x40] sm:$0xff]
    %v720 = vld [vmem:[#allocation14 + $0x48] sm:$0xff]
    %v721 = vld [vmem:[#allocation14 + $0x50] sm:$0xff]
    %v722 = vld [vmem:[#allocation14 + $0x58] sm:$0xff]
    %v723 = vld [vmem:[#allocation14 + $0x60] sm:$0xff]
    %v724 = vld [vmem:[#allocation14 + $0x68] sm:$0xff]
    %v725 = vld [vmem:[#allocation14 + $0x70] sm:$0xff]
    %v726 = vld [vmem:[#allocation14 + $0x78] sm:$0xff]
    %v727 = vld [vmem:[#allocation14 + $0x80] sm:$0xff]
    %v728 = vld [vmem:[#allocation14 + $0x88] sm:$0xff]
    %v729 = vld [vmem:[#allocation14 + $0x90] sm:$0xff]
    %v730 = vld [vmem:[#allocation14 + $0x98] sm:$0xff]
    %v731 = vld [vmem:[#allocation14 + $0xa0] sm:$0xff]
    %v732 = vld [vmem:[#allocation14 + $0xa8] sm:$0xff]
    %v733 = vld [vmem:[#allocation14 + $0xb0] sm:$0xff]
    %v734 = vld [vmem:[#allocation14 + $0xb8] sm:$0xff]
    %v735 = vld [vmem:[#allocation14 + $0xc0] sm:$0xff]
    %v736 = vld [vmem:[#allocation14 + $0xc8] sm:$0xff]
    %v737 = vld [vmem:[#allocation14 + $0xd0] sm:$0xff]
    %v738 = vld [vmem:[#allocation14 + $0xd8] sm:$0xff]
    %v739 = vld [vmem:[#allocation14 + $0xe0] sm:$0xff]
    %v740 = vld [vmem:[#allocation14 + $0xe8] sm:$0xff]
    %v741 = vld [vmem:[#allocation14 + $0xf0] sm:$0xff]
    %v742 = vld [vmem:[#allocation14 + $0xf8] sm:$0xff]
    %v743 = vld [vmem:[#allocation14 + $0x100] sm:$0xff]
    %v744 = vld [vmem:[#allocation14 + $0x108] sm:$0xff]
    %v745 = vld [vmem:[#allocation14 + $0x110] sm:$0xff]
    %v746 = vld [vmem:[#allocation14 + $0x118] sm:$0xff]
    %v747 = vld [vmem:[#allocation14 + $0x120] sm:$0xff]
    %v748 = vld [vmem:[#allocation14 + $0x128] sm:$0xff]
    %v749 = vld [vmem:[#allocation14 + $0x130] sm:$0xff]
    %v750 = vld [vmem:[#allocation14 + $0x138] sm:$0xff]
    %v751 = vld [vmem:[#allocation14 + $0x140] sm:$0xff]
    %v752 = vld [vmem:[#allocation14 + $0x148] sm:$0xff]
    %v753 = vld [vmem:[#allocation14 + $0x150] sm:$0xff]
    %v754 = vld [vmem:[#allocation14 + $0x158] sm:$0xff]
    %v755 = vld [vmem:[#allocation14 + $0x160] sm:$0xff]
    %v756 = vld [vmem:[#allocation14 + $0x168] sm:$0xff]
    %v757 = vld [vmem:[#allocation14 + $0x170] sm:$0xff]
    %v758 = vld [vmem:[#allocation14 + $0x178] sm:$0xff]
    %v759 = vld [vmem:[#allocation14 + $0x180] sm:$0xff]
    %v760 = vld [vmem:[#allocation14 + $0x188] sm:$0xff]
    %v761 = vld [vmem:[#allocation14 + $0x190] sm:$0xff]
    %v762 = vld [vmem:[#allocation14 + $0x198] sm:$0xff]
    %v763 = vld [vmem:[#allocation14 + $0x1a0] sm:$0xff]
    %v764 = vld [vmem:[#allocation14 + $0x1a8] sm:$0xff]
    %v765 = vld [vmem:[#allocation14 + $0x1b0] sm:$0xff]
    %v766 = vld [vmem:[#allocation14 + $0x1b8] sm:$0xff]
    %v767 = vld [vmem:[#allocation14 + $0x1c0] sm:$0xff]
    %v768 = vld [vmem:[#allocation14 + $0x1c8] sm:$0xff]
    %v769 = vld [vmem:[#allocation14 + $0x1d0] sm:$0xff]
    %v770 = vld [vmem:[#allocation14 + $0x1d8] sm:$0xff]
    %v771 = vld [vmem:[#allocation14 + $0x1e0] sm:$0xff]
    %v772 = vld [vmem:[#allocation14 + $0x1e8] sm:$0xff]
    %v773 = vld [vmem:[#allocation14 + $0x1f0] sm:$0xff]
    %v774 = vld [vmem:[#allocation14 + $0x1f8] sm:$0xff]
    %v775 = vld [vmem:[%s10] sm:$0x1]
    %v777 = vlaneseq
    %v778 = vshrl.u32 %v777, 7
    %v779 = vsub.s32 0, %v778
    %v780 = vrot.slane %v775, %v779
    %782 = vmatprep.subr.mxu0 0.0
    %783 = vmatpush1.msra.mxu0 %v726
    %784 = vmatprep.subr.mxu0 0.0
    %785 = vmatpush1.msra.mxu0 %v725
    %786 = vmatprep.subr.mxu0 0.0
    %787 = vmatpush1.msra.mxu0 %v724
    %788 = vmatprep.subr.mxu0 0.0
    %789 = vmatpush1.msra.mxu0 %v723
    %790 = vmatprep.subr.mxu0 0.0
    %791 = vmatpush1.msra.mxu0 %v722
    %792 = vmatprep.subr.mxu0 0.0
    %793 = vmatpush1.msra.mxu0 %v721
    %794 = vmatprep.subr.mxu0 0.0
    %795 = vmatpush1.msra.mxu0 %v720
    %796 = vmatprep.subr.mxu0 0.0
    %797 = vmatpush1.msra.mxu0 %v719
    %798 = vmatprep.subr.mxu0 0.0
    %799 = vmatpush1.msra.mxu0 %v718
    %800 = vmatprep.subr.mxu0 0.0
    %801 = vmatpush1.msra.mxu0 %v717
    %802 = vmatprep.subr.mxu0 0.0
    %803 = vmatpush1.msra.mxu0 %v716
    %804 = vmatprep.subr.mxu0 0.0
    %805 = vmatpush1.msra.mxu0 %v715
    %806 = vmatprep.subr.mxu0 0.0
    %807 = vmatpush1.msra.mxu0 %v714
    %808 = vmatprep.subr.mxu0 0.0
    %809 = vmatpush1.msra.mxu0 %v713
    %810 = vmatprep.subr.mxu0 0.0
    %811 = vmatpush1.msra.mxu0 %v712
    %812 = vmatprep.subr.mxu0 0.0
    %813 = vmatpush1.msra.mxu0 %v711
    %814 = vmatprep.subr.mxu0 0.0
    %815 = vmatpush2.msra.mxu0 %v742
    %816 = vmatprep.subr.mxu0 0.0
    %817 = vmatpush2.msra.mxu0 %v741
    %818 = vmatprep.subr.mxu0 0.0
    %819 = vmatpush2.msra.mxu0 %v740
    %820 = vmatprep.subr.mxu0 0.0
    %821 = vmatpush2.msra.mxu0 %v739
    %822 = vmatprep.subr.mxu0 0.0
    %823 = vmatpush2.msra.mxu0 %v738
    %824 = vmatprep.subr.mxu0 0.0
    %825 = vmatpush2.msra.mxu0 %v737
    %826 = vmatprep.subr.mxu0 0.0
    %827 = vmatpush2.msra.mxu0 %v736
    %828 = vmatprep.subr.mxu0 0.0
    %829 = vmatpush2.msra.mxu0 %v735
    %830 = vmatprep.subr.mxu0 0.0
    %831 = vmatpush2.msra.mxu0 %v734
    %832 = vmatprep.subr.mxu0 0.0
    %833 = vmatpush2.msra.mxu0 %v733
    %834 = vmatprep.subr.mxu0 0.0
    %835 = vmatpush2.msra.mxu0 %v732
    %836 = vmatprep.subr.mxu0 0.0
    %837 = vmatpush2.msra.mxu0 %v731
    %838 = vmatprep.subr.mxu0 0.0
    %839 = vmatpush2.msra.mxu0 %v730
    %840 = vmatprep.subr.mxu0 0.0
    %841 = vmatpush2.msra.mxu0 %v729
    %842 = vmatprep.subr.mxu0 0.0
    %843 = vmatpush2.msra.mxu0 %v728
    %844 = vmatprep.subr.mxu0 0.0
    %845 = vmatpush2.msra.mxu0 %v727
    %846 = vmatprep.mubr.f32.mxu0 %v708
    %847 = vmatmul.mubr.f32.gmra.mxu0 %v707
    %v848 = vpop.f32.mrf.mxu0
    %v849 = vadd.f32 %v780, %v848
    %v850 = vpop.f32.mrf.mxu0
    %851 = vdwg.mxu0
    %852 = vmatprep.subr.mxu0 0.0
    %853 = vmatpush1.msra.mxu0 %v758
    %854 = vmatprep.subr.mxu0 0.0
    %855 = vmatpush1.msra.mxu0 %v757
    %856 = vmatprep.subr.mxu0 0.0
    %857 = vmatpush1.msra.mxu0 %v756
    %858 = vmatprep.subr.mxu0 0.0
    %859 = vmatpush1.msra.mxu0 %v755
    %860 = vmatprep.subr.mxu0 0.0
    %861 = vmatpush1.msra.mxu0 %v754
    %862 = vmatprep.subr.mxu0 0.0
    %863 = vmatpush1.msra.mxu0 %v753
    %864 = vmatprep.subr.mxu0 0.0
    %865 = vmatpush1.msra.mxu0 %v752
    %866 = vmatprep.subr.mxu0 0.0
    %867 = vmatpush1.msra.mxu0 %v751
    %868 = vmatprep.subr.mxu0 0.0
    %869 = vmatpush1.msra.mxu0 %v750
    %870 = vmatprep.subr.mxu0 0.0
    %871 = vmatpush1.msra.mxu0 %v749
    %872 = vmatprep.subr.mxu0 0.0
    %873 = vmatpush1.msra.mxu0 %v748
    %874 = vmatprep.subr.mxu0 0.0
    %875 = vmatpush1.msra.mxu0 %v747
    %876 = vmatprep.subr.mxu0 0.0
    %877 = vmatpush1.msra.mxu0 %v746
    %878 = vmatprep.subr.mxu0 0.0
    %879 = vmatpush1.msra.mxu0 %v745
    %880 = vmatprep.subr.mxu0 0.0
    %881 = vmatpush1.msra.mxu0 %v744
    %882 = vmatprep.subr.mxu0 0.0
    %883 = vmatpush1.msra.mxu0 %v743
    %884 = vmatprep.subr.mxu0 0.0
    %885 = vmatpush2.msra.mxu0 %v774
    %886 = vmatprep.subr.mxu0 0.0
    %887 = vmatpush2.msra.mxu0 %v773
    %888 = vmatprep.subr.mxu0 0.0
    %889 = vmatpush2.msra.mxu0 %v772
    %890 = vmatprep.subr.mxu0 0.0
    %891 = vmatpush2.msra.mxu0 %v771
    %892 = vmatprep.subr.mxu0 0.0
    %893 = vmatpush2.msra.mxu0 %v770
    %894 = vmatprep.subr.mxu0 0.0
    %895 = vmatpush2.msra.mxu0 %v769
    %896 = vmatprep.subr.mxu0 0.0
    %897 = vmatpush2.msra.mxu0 %v768
    %898 = vmatprep.subr.mxu0 0.0
    %899 = vmatpush2.msra.mxu0 %v767
    %900 = vmatprep.subr.mxu0 0.0
    %901 = vmatpush2.msra.mxu0 %v766
    %902 = vmatprep.subr.mxu0 0.0
    %903 = vmatpush2.msra.mxu0 %v765
    %904 = vmatprep.subr.mxu0 0.0
    %905 = vmatpush2.msra.mxu0 %v764
    %906 = vmatprep.subr.mxu0 0.0
    %907 = vmatpush2.msra.mxu0 %v763
    %908 = vmatprep.subr.mxu0 0.0
    %909 = vmatpush2.msra.mxu0 %v762
    %910 = vmatprep.subr.mxu0 0.0
    %911 = vmatpush2.msra.mxu0 %v761
    %912 = vmatprep.subr.mxu0 0.0
    %913 = vmatpush2.msra.mxu0 %v760
    %914 = vmatprep.subr.mxu0 0.0
    %915 = vmatpush2.msra.mxu0 %v759
    %916 = vmatprep.mubr.f32.mxu0 %v710
    %917 = vmatmul.mubr.f32.gmra.mxu0 %v709
    %v918 = vpop.f32.mrf.mxu0
    %v919 = vadd.f32 %v849, %v918
    %v920 = vpop.f32.mrf.mxu0
    %921 = vdwg.mxu0
    %v922 = vtanh.pop %v919
    %v923 = vld [vmem:[%s11] sm:$0x1]
    %v924 = vld [vmem:[#allocation2] sm:$0x1]
    %926 = vset.pattern.permute.xlu0 0
    %927 = vperm.xlu0 %926, %v924
    %v928 = vpop.permute.xlu0 %927
    %v930 = vlaneseq
    %v931 = vshrl.u32 %v930, 7
    %v932 = vsub.s32 0, %v931
    %v933 = vrot.slane %v928, %v932
    %934 = vmatprep.subr.mxu0 0.0
    %935 = vmatpush1.xpose.msra.mxu0 0.0
    %936 = vmatprep.subr.mxu0 0.0
    %937 = vmatpush1.xpose.msra.mxu0 0.0
    %938 = vmatprep.subr.mxu0 0.0
    %939 = vmatpush1.xpose.msra.mxu0 0.0
    %940 = vmatprep.subr.mxu0 0.0
    %941 = vmatpush1.xpose.msra.mxu0 0.0
    %942 = vmatprep.subr.mxu0 0.0
    %943 = vmatpush1.xpose.msra.mxu0 0.0
    %944 = vmatprep.subr.mxu0 0.0
    %945 = vmatpush1.xpose.msra.mxu0 0.0
    %946 = vmatprep.subr.mxu0 0.0
    %947 = vmatpush1.xpose.msra.mxu0 0.0
    %948 = vmatprep.subr.mxu0 0.0
    %949 = vmatpush1.xpose.msra.mxu0 0.0
    %950 = vmatprep.subr.mxu0 0.0
    %951 = vmatpush1.xpose.msra.mxu0 0.0
    %952 = vmatprep.subr.mxu0 0.0
    %953 = vmatpush1.xpose.msra.mxu0 0.0
    %954 = vmatprep.subr.mxu0 0.0
    %955 = vmatpush1.xpose.msra.mxu0 0.0
    %956 = vmatprep.subr.mxu0 0.0
    %957 = vmatpush1.xpose.msra.mxu0 0.0
    %958 = vmatprep.subr.mxu0 0.0
    %959 = vmatpush1.xpose.msra.mxu0 0.0
    %960 = vmatprep.subr.mxu0 0.0
    %961 = vmatpush1.xpose.msra.mxu0 0.0
    %962 = vmatprep.subr.mxu0 0.0
    %963 = vmatpush1.xpose.msra.mxu0 0.0
    %964 = vmatprep.subr.mxu0 0.0
    %965 = vmatpush1.xpose.msra.mxu0 %v922
    %966 = vmatprep.subr.mxu0 0.0
    %967 = vmatpush2.xpose.msra.mxu0 0.0
    %968 = vmatprep.subr.mxu0 0.0
    %969 = vmatpush2.xpose.msra.mxu0 0.0
    %970 = vmatprep.subr.mxu0 0.0
    %971 = vmatpush2.xpose.msra.mxu0 0.0
    %972 = vmatprep.subr.mxu0 0.0
    %973 = vmatpush2.xpose.msra.mxu0 0.0
    %974 = vmatprep.subr.mxu0 0.0
    %975 = vmatpush2.xpose.msra.mxu0 0.0
    %976 = vmatprep.subr.mxu0 0.0
    %977 = vmatpush2.xpose.msra.mxu0 0.0
    %978 = vmatprep.subr.mxu0 0.0
    %979 = vmatpush2.xpose.msra.mxu0 0.0
    %980 = vmatprep.subr.mxu0 0.0
    %981 = vmatpush2.xpose.msra.mxu0 0.0
    %982 = vmatprep.subr.mxu0 0.0
    %983 = vmatpush2.xpose.msra.mxu0 0.0
    %984 = vmatprep.subr.mxu0 0.0
    %985 = vmatpush2.xpose.msra.mxu0 0.0
    %986 = vmatprep.subr.mxu0 0.0
    %987 = vmatpush2.xpose.msra.mxu0 0.0
    %988 = vmatprep.subr.mxu0 0.0
    %989 = vmatpush2.xpose.msra.mxu0 0.0
    %990 = vmatprep.subr.mxu0 0.0
    %991 = vmatpush2.xpose.msra.mxu0 0.0
    %992 = vmatprep.subr.mxu0 0.0
    %993 = vmatpush2.xpose.msra.mxu0 0.0
    %994 = vmatprep.subr.mxu0 0.0
    %995 = vmatpush2.xpose.msra.mxu0 0.0
    %996 = vmatprep.subr.mxu0 0.0
    %997 = vmatpush2.xpose.msra.mxu0 0.0
    %998 = vmatprep.mubr.f32.mxu0 0.0
    %999 = vmatmul.mubr.f32.gmra.mxu0 %v923
    %v1000 = vpop.f32.mrf.mxu0
    %v1001 = vadd.f32 %v933, %v1000
    %v1002 = vpop.f32.mrf.mxu0
    %1003 = vdwg.mxu0
    %v1004 = vxor.u32 %v1001, 2147483648
    %v1005 = vmul.f32 %v1004, 1.442695
    %v1006 = vpow.pop %v1005
    %v1007 = vadd.f32 %v1006, 1.0
    %v1008 = vrcp.pop %v1007
    %v1009 = vmul.f32 1.0, %v1008
    %vm1010 = vcmask 57344
    %1011 = vst.msk [vmem:[#allocation15] sm:$0x1] %vm1010, %v1009
    // Predicated region
    $region82: #{tpu_custom_call.1} parent=1 // pred_check
      _
    $region83: #{tpu_custom_call.1} parent=1 // pred_check_branch
      %1013 = sbr.rel (0) target = $region85
    $region84: #{tpu_custom_call.1} parent=1 // pred_region
      %s1015 = ssub.s32 16, 16
      %1016 = vsyncadd [#allocation5], %s1015
      %s1018 = sshll.u32 [#allocation15], 4
      %s1019 = int_to_ptr.vmem [resolvable:$true] %s1018
      %1021 = dma.vmem_to_hbm [thread:$0]  %s1019, 16, %s13, [#allocation5]
    $region85: #{tpu_custom_call.1} parent=1 // pred_fallthru
      _
    // Predicated region
    $region86: #{tpu_custom_call.1} parent=1 // pred_check
      _
    $region87: #{tpu_custom_call.1} parent=1 // pred_check_branch
      %1023 = sbr.rel (0) target = $region89
    $region88: #{tpu_custom_call.1} parent=1 // pred_region
      %1024 = dma.done [#allocation5], 16
    $region89: #{tpu_custom_call.1} parent=1 // pred_fallthru
      _
    %1025 = vsyncpa [#allocation4], 1
    %1026 = vsyncpa [#allocation7], 1
    %1027 = vsyncpa [#allocation10], 1
    %1028 = vsyncpa [#allocation13], 1
    %1029 = vsyncpa [#allocation5], 1

</llo_original>
